<compile_context>
chip_gen: v7x
topology: tpu7x:2x2x1
jax: 0.10.0
libtpu: 0.0.40
codegen_flags: <defaults>
</compile_context>

<pallas_src>
import functools
import jax
import jax.numpy as jnp
from jax.experimental import pallas as pl
from jax.experimental.pallas import tpu as pltpu


# Safe on v7x (64 MiB physical VMEM) while still well above the v5e/v6e scoped
# defaults.  TODO(synk): per-generation tile/limit selection (bigger on v6e).
_VMEM_LIMIT = 48 * 1024 * 1024


def _tile(dim, pref, granule):
    """Largest multiple of `granule` that divides `dim` and is <= `pref`.

    Falls back to the full dim (always a legal Pallas block).  Granule 8 for
    sublane (second-to-last) dims, 128 for lane (last) dims keeps the (8, 128)
    block constraint satisfied while still pipelining large shapes.
    """
    if dim <= pref:
        return dim
    t = (pref // granule) * granule
    while t >= granule:
        if dim % t == 0:
            return t
        t -= granule
    return dim


# --------------------------------------------------------------------------
# Tiled linear:  (M, K) @ (K, N) + b   (bf16 MXU, f32 accumulator)
# --------------------------------------------------------------------------

def _linear_kernel(x_ref, w_ref, b_ref, o_ref, acc_ref):
    k = pl.program_id(2)

    @pl.when(k == 0)
    def _():
        acc_ref[...] = jnp.zeros_like(acc_ref)

    acc_ref[...] += jnp.dot(x_ref[...].astype(jnp.bfloat16), w_ref[...],
                            preferred_element_type=jnp.float32)

    @pl.when(k == pl.num_programs(2) - 1)
    def _():
        o_ref[...] = (acc_ref[...] + b_ref[...]).astype(o_ref.dtype)


def linear_2d(x2, w, b, out_dtype, *, tm_pref=256, tn_pref=256, tk_pref=512):
    M, K = x2.shape
    N = w.shape[1]
    tm = _tile(M, tm_pref, 8)
    tn = _tile(N, tn_pref, 128)
    tk = _tile(K, tk_pref, 128)
    gm, gn, gk = M // tm, N // tn, K // tk
    ce = pl.CostEstimate(
        flops=2 * M * N * K, transcendentals=0,
        bytes_accessed=(gn * M * K * x2.dtype.itemsize          # x re-streamed per N tile
                        + gm * K * N * w.dtype.itemsize         # w re-streamed per M tile
                        + M * N * jnp.dtype(out_dtype).itemsize))
    return pl.pallas_call(
        _linear_kernel,
        out_shape=jax.ShapeDtypeStruct((M, N), out_dtype),
        grid_spec=pltpu.PrefetchScalarGridSpec(
            num_scalar_prefetch=0,
            grid=(gm, gn, gk),
            in_specs=[
                pl.BlockSpec((tm, tk), lambda i, j, k: (i, k)),
                pl.BlockSpec((tk, tn), lambda i, j, k: (k, j)),
                pl.BlockSpec((1, tn), lambda i, j, k: (0, j)),
            ],
            out_specs=pl.BlockSpec((tm, tn), lambda i, j, k: (i, j)),
            scratch_shapes=[pltpu.VMEM((tm, tn), jnp.float32)],
        ),
        compiler_params=pltpu.CompilerParams(
            dimension_semantics=("parallel", "parallel", "arbitrary"),
            vmem_limit_bytes=_VMEM_LIMIT),
        cost_estimate=ce,
    )(x2, w, b.reshape(1, N))


def linear(x, w, b, out_dtype=None):
    """x: (B, L, Din) -> (B, L, Dout) via the tiled Pallas matmul."""
    B, L, Din = x.shape
    Dout = w.shape[1]
    if out_dtype is None:
        out_dtype = x.dtype
    return linear_2d(x.reshape(B * L, Din), w, b, out_dtype).reshape(B, L, Dout)


# --------------------------------------------------------------------------
# Fused linear + residual-add + LayerNorm (post-norm) in the finalize epilogue
#   out = LayerNorm((x @ w + b) + res)
# --------------------------------------------------------------------------

def _linear_res_ln_kernel(x_ref, w_ref, b_ref, res_ref, g_ref, bn_ref, o_ref,
                          acc_ref, *, eps):
    k = pl.program_id(1)

    @pl.when(k == 0)
    def _():
        acc_ref[...] = jnp.zeros_like(acc_ref)

    acc_ref[...] += jnp.dot(x_ref[...].astype(jnp.bfloat16), w_ref[...],
                            preferred_element_type=jnp.float32)

    @pl.when(k == pl.num_programs(1) - 1)
    def _():
        y = acc_ref[...] + b_ref[...] + res_ref[...].astype(jnp.float32)
        mu = jnp.mean(y, axis=-1, keepdims=True)
        yc = y - mu
        var = jnp.mean(yc * yc, axis=-1, keepdims=True)
        yn = yc * jax.lax.rsqrt(var + eps)
        o_ref[...] = (yn * g_ref[...] + bn_ref[...]).astype(o_ref.dtype)


def linear_residual_layernorm(x, w, b, res, gamma, beta, eps=1e-5,
                              *, tm_pref=256, tk_pref=512):
    """x: (B, L, K); returns LayerNorm(x @ w + b + res): (B, L, N), dtype of res."""
    B, L, K = x.shape
    N = w.shape[1]
    M = B * L
    tm = _tile(M, tm_pref, 8)
    tk = _tile(K, tk_pref, 128)
    gm, gk = M // tm, K // tk
    ce = pl.CostEstimate(
        flops=2 * M * N * K + 10 * M * N, transcendentals=M,
        bytes_accessed=(M * K * x.dtype.itemsize
                        + gm * K * N * w.dtype.itemsize
                        + 2 * M * N * 4))
    out = pl.pallas_call(
        functools.partial(_linear_res_ln_kernel, eps=eps),
        out_shape=jax.ShapeDtypeStruct((M, N), res.dtype),
        grid_spec=pltpu.PrefetchScalarGridSpec(
            num_scalar_prefetch=0,
            grid=(gm, gk),
            in_specs=[
                pl.BlockSpec((tm, tk), lambda i, k: (i, k)),
                pl.BlockSpec((tk, N), lambda i, k: (k, 0)),
                pl.BlockSpec((1, N), lambda i, k: (0, 0)),
                pl.BlockSpec((tm, N), lambda i, k: (i, 0)),
                pl.BlockSpec((1, N), lambda i, k: (0, 0)),
                pl.BlockSpec((1, N), lambda i, k: (0, 0)),
            ],
            out_specs=pl.BlockSpec((tm, N), lambda i, k: (i, 0)),
            scratch_shapes=[pltpu.VMEM((tm, N), jnp.float32)],
        ),
        compiler_params=pltpu.CompilerParams(
            dimension_semantics=("parallel", "arbitrary"),
            vmem_limit_bytes=_VMEM_LIMIT),
        cost_estimate=ce,
    )(x.reshape(M, K), w, b.reshape(1, N), res.reshape(M, N),
      gamma.reshape(1, N), beta.reshape(1, N))
    return out.reshape(B, L, N)


# --------------------------------------------------------------------------
# Fused position-wise FFN + residual-add + LayerNorm
#   out = LayerNorm(relu(x @ w1 + b1) @ w2 + b2 + res)
# --------------------------------------------------------------------------

def _ffn_res_ln_kernel(x_ref, w1_ref, b1_ref, w2_ref, b2_ref, res_ref, g_ref,
                       bn_ref, o_ref, acc_ref, *, eps):
    j = pl.program_id(1)

    @pl.when(j == 0)
    def _():
        acc_ref[...] = jnp.zeros_like(acc_ref)

    h = jnp.dot(x_ref[...].astype(jnp.bfloat16), w1_ref[...],
                preferred_element_type=jnp.float32)
    h = jnp.maximum(h + b1_ref[...], 0.0)                        # ReLU (f32)
    acc_ref[...] += jnp.dot(h.astype(jnp.bfloat16), w2_ref[...],
                            preferred_element_type=jnp.float32)

    @pl.when(j == pl.num_programs(1) - 1)
    def _():
        y = acc_ref[...] + b2_ref[...] + res_ref[...].astype(jnp.float32)
        mu = jnp.mean(y, axis=-1, keepdims=True)
        yc = y - mu
        var = jnp.mean(yc * yc, axis=-1, keepdims=True)
        yn = yc * jax.lax.rsqrt(var + eps)
        o_ref[...] = (yn * g_ref[...] + bn_ref[...]).astype(o_ref.dtype)


def ffn_residual_layernorm(x, w1, b1, w2, b2, res, gamma, beta, eps=1e-5,
                           *, tm_pref=256, tf_pref=512):
    B, L, D = x.shape
    F = w1.shape[1]
    M = B * L
    tm = _tile(M, tm_pref, 8)
    tf = _tile(F, tf_pref, 128)
    gm, gf = M // tm, F // tf
    ce = pl.CostEstimate(
        flops=4 * M * D * F + 10 * M * D, transcendentals=M,
        bytes_accessed=(M * D * x.dtype.itemsize
                        + gm * 2 * D * F * w1.dtype.itemsize     # w1/w2 re-streamed per M tile
                        + 2 * M * D * 4))
    out = pl.pallas_call(
        functools.partial(_ffn_res_ln_kernel, eps=eps),
        out_shape=jax.ShapeDtypeStruct((M, D), res.dtype),
        grid_spec=pltpu.PrefetchScalarGridSpec(
            num_scalar_prefetch=0,
            grid=(gm, gf),
            in_specs=[
                pl.BlockSpec((tm, D), lambda i, j: (i, 0)),
                pl.BlockSpec((D, tf), lambda i, j: (0, j)),
                pl.BlockSpec((1, tf), lambda i, j: (0, j)),
                pl.BlockSpec((tf, D), lambda i, j: (j, 0)),
                pl.BlockSpec((1, D), lambda i, j: (0, 0)),
                pl.BlockSpec((tm, D), lambda i, j: (i, 0)),
                pl.BlockSpec((1, D), lambda i, j: (0, 0)),
                pl.BlockSpec((1, D), lambda i, j: (0, 0)),
            ],
            out_specs=pl.BlockSpec((tm, D), lambda i, j: (i, 0)),
            scratch_shapes=[pltpu.VMEM((tm, D), jnp.float32)],
        ),
        compiler_params=pltpu.CompilerParams(
            dimension_semantics=("parallel", "arbitrary"),
            vmem_limit_bytes=_VMEM_LIMIT),
        cost_estimate=ce,
    )(x.reshape(M, D), w1, b1.reshape(1, F), w2, b2.reshape(1, D),
      res.reshape(M, D), gamma.reshape(1, D), beta.reshape(1, D))
    return out.reshape(B, L, D)


# --------------------------------------------------------------------------
# Flash-style attention, layout-native:
#   q: (B, Lq, D) with heads packed along D; kv: (B, Lk, 2D) = [K | V] fused.
#   grid = (B, Lq-tiles, Lk-tiles), kv innermost; heads are a static in-kernel
#   loop over lane slices of width Dh; output written lane-dense to (B, Lq, D).
# --------------------------------------------------------------------------

def _flash_attn_kernel(q_ref, kv_ref, o_ref, m_sc, l_sc, acc_sc, *, n_head):
    ki = pl.program_id(2)

    @pl.when(ki == 0)
    def _():
        m_sc[...] = jnp.full(m_sc.shape, -jnp.inf, m_sc.dtype)
        l_sc[...] = jnp.zeros(l_sc.shape, l_sc.dtype)
        acc_sc[...] = jnp.zeros(acc_sc.shape, acc_sc.dtype)

    q = q_ref[0]                    # (tq, D)  bf16; softmax scale folded into Wq
    kvb = kv_ref[0]                 # (tk, 2D) bf16; [:, :D] = K, [:, D:] = V
    d = q.shape[-1]
    dh = d // n_head

    for h in range(n_head):         # static unroll over heads (lane slices)
        sl = slice(h * dh, (h + 1) * dh)
        vsl = slice(d + h * dh, d + (h + 1) * dh)
        # scores: contract on the head dim of Q and K (no transpose materialized)
        s = jnp.einsum("qd,kd->qk", q[:, sl], kvb[:, sl],
                       preferred_element_type=jnp.float32)        # (tq, tk) f32
        m_prev = m_sc[h]                                           # (tq, 1)
        m_new = jnp.maximum(m_prev, jnp.max(s, axis=-1, keepdims=True))
        alpha = jnp.exp(m_prev - m_new)
        p = jnp.exp(s - m_new)
        l_sc[h] = alpha * l_sc[h] + jnp.sum(p, axis=-1, keepdims=True)
        acc_sc[:, sl] = alpha * acc_sc[:, sl] + jnp.dot(
            p.astype(kvb.dtype), kvb[:, vsl],
            preferred_element_type=jnp.float32)
        m_sc[h] = m_new

    @pl.when(ki == pl.num_programs(2) - 1)
    def _():
        for h in range(n_head):
            sl = slice(h * dh, (h + 1) * dh)
            acc_sc[:, sl] = acc_sc[:, sl] * pl.reciprocal(l_sc[h], approx=True)
        o_ref[0] = acc_sc[...].astype(o_ref.dtype)                 # lane-dense store


def _sdpa(q, kv, n_head, *, tq_pref=256, tk_pref=256):
    """q: (B, Lq, D); kv: (B, Lk, 2D). Returns (B, Lq, D) in q.dtype."""
    B, Lq, D = q.shape
    Lk = kv.shape[1]
    tq = _tile(Lq, tq_pref, 8)
    tk = _tile(Lk, tk_pref, 8)
    gq, gk = Lq // tq, Lk // tk
    ce = pl.CostEstimate(
        flops=4 * B * Lq * Lk * D,
        transcendentals=B * n_head * Lq * Lk,
        bytes_accessed=(B * Lq * D * q.dtype.itemsize
                        + gq * B * Lk * 2 * D * kv.dtype.itemsize  # kv re-streamed per q tile
                        + B * Lq * D * q.dtype.itemsize))
    return pl.pallas_call(
        functools.partial(_flash_attn_kernel, n_head=n_head),
        out_shape=jax.ShapeDtypeStruct((B, Lq, D), q.dtype),
        grid_spec=pltpu.PrefetchScalarGridSpec(
            num_scalar_prefetch=0,
            grid=(B, gq, gk),
            in_specs=[
                pl.BlockSpec((1, tq, D), lambda b, qi, ki: (b, qi, 0)),
                pl.BlockSpec((1, tk, 2 * D), lambda b, qi, ki: (b, ki, 0)),
            ],
            out_specs=pl.BlockSpec((1, tq, D), lambda b, qi, ki: (b, qi, 0)),
            scratch_shapes=[
                pltpu.VMEM((n_head, tq, 1), jnp.float32),   # running max (per head)
                pltpu.VMEM((n_head, tq, 1), jnp.float32),   # running denom (per head)
                pltpu.VMEM((tq, D), jnp.float32),           # running numerator
            ],
        ),
        compiler_params=pltpu.CompilerParams(
            dimension_semantics=("parallel", "parallel", "arbitrary"),
            vmem_limit_bytes=_VMEM_LIMIT),
        cost_estimate=ce,
    )(q, kv)


def multi_head_attention(q_in, kv_in, p):
    """q_in: (B, Lq, D); kv_in: (B, Lk, D).  Returns the attention context in
    (B, Lq, D) layout (heads packed along D), bf16.  The output projection is
    fused with residual+LayerNorm at the call site."""
    q = linear(q_in, p["wq"], p["bq"], out_dtype=jnp.bfloat16)     # scale pre-folded
    kv = linear(kv_in, p["w_kv"], p["b_kv"], out_dtype=jnp.bfloat16)
    return _sdpa(q, kv, p["n_head"])


# --------------------------------------------------------------------------
# Decoder layer / stack
# --------------------------------------------------------------------------

def decoder_layer(query, value, lp):
    # TODO(synk): no causal/key-padding mask — matches the reference forward,
    # which passes none; dropout (drop_prob) is identity (eval mode).
    # 1) self-attention -> fused Wo projection + residual + LayerNorm (post-norm)
    ctx = multi_head_attention(query, query, lp["self_attn"])
    x = linear_residual_layernorm(ctx, lp["self_attn"]["wo"], lp["self_attn"]["bo"],
                                  query, lp["norm1_g"], lp["norm1_b"])
    # 2) cross-attention (enc-dec) -> fused Wo projection + residual + LayerNorm
    ctx = multi_head_attention(x, value, lp["cross_attn"])
    x = linear_residual_layernorm(ctx, lp["cross_attn"]["wo"], lp["cross_attn"]["bo"],
                                  x, lp["norm2_g"], lp["norm2_b"])
    # 3) position-wise FFN -> fused residual + LayerNorm
    x = ffn_residual_layernorm(x, lp["ffn_w1"], lp["ffn_b1"],
                               lp["ffn_w2"], lp["ffn_b2"],
                               x, lp["norm3_g"], lp["norm3_b"])
    return x


def transformer_decoder(query, value, params):
    for lp in params["layers"]:
        query = decoder_layer(query, value, lp)
    return query


# --------------------------------------------------------------------------
# Deterministic parameter initialization (weights bf16, biases / LN params f32)
# --------------------------------------------------------------------------

def _init_attn_params(key, hid_dim, n_head):
    ks = jax.random.split(key, 4)
    dh = hid_dim // n_head
    scale = 1.0 / (dh ** 0.5)

    def w(k):
        return 0.02 * jax.random.normal(k, (hid_dim, hid_dim), dtype=jnp.float32)

    wq, wk, wv, wo = w(ks[0]), w(ks[1]), w(ks[2]), w(ks[3])
    return {
        "n_head": n_head,
        # 1/sqrt(dh) softmax scale folded into the Q projection (weights + bias;
        # bias is zero here, but it would be scaled too).
        "wq": (wq * scale).astype(jnp.bfloat16),
        "bq": jnp.zeros((hid_dim,), jnp.float32),
        # fused K|V projection
        "w_kv": jnp.concatenate([wk, wv], axis=1).astype(jnp.bfloat16),
        "b_kv": jnp.zeros((2 * hid_dim,), jnp.float32),
        # output projection (fused with residual + LayerNorm at call site)
        "wo": wo.astype(jnp.bfloat16),
        "bo": jnp.zeros((hid_dim,), jnp.float32),
    }


def init_decoder_params(key, hid_dim, ffn_dim, n_head, n_layers):
    layers = []
    keys = jax.random.split(key, n_layers)
    for lk in keys:
        k1, k2, k3, k4 = jax.random.split(lk, 4)
        layers.append({
            "self_attn": _init_attn_params(k1, hid_dim, n_head),
            "cross_attn": _init_attn_params(k2, hid_dim, n_head),
            "ffn_w1": (0.02 * jax.random.normal(k3, (hid_dim, ffn_dim))).astype(jnp.bfloat16),
            "ffn_b1": jnp.zeros((ffn_dim,), jnp.float32),
            "ffn_w2": (0.02 * jax.random.normal(k4, (ffn_dim, hid_dim))).astype(jnp.bfloat16),
            "ffn_b2": jnp.zeros((hid_dim,), jnp.float32),
            "norm1_g": jnp.ones((hid_dim,), jnp.float32),
            "norm1_b": jnp.zeros((hid_dim,), jnp.float32),
            "norm2_g": jnp.ones((hid_dim,), jnp.float32),
            "norm2_b": jnp.zeros((hid_dim,), jnp.float32),
            "norm3_g": jnp.ones((hid_dim,), jnp.float32),
            "norm3_b": jnp.zeros((hid_dim,), jnp.float32),
        })
    return {"layers": layers}


# --------------------------------------------------------------------------
# Main
# --------------------------------------------------------------------------

if __name__ == "__main__":
    # Small shapes: batch=2, seq=8, hid_dim=32, ffn_dim=64, n_head=4, n_layers=2
    B, L, D, F, H, NL = 2, 8, 32, 64, 4, 2
    key = jax.random.PRNGKey(0)
    kq, kv, kp = jax.random.split(key, 3)

    query = jax.random.normal(kq, (B, L, D), dtype=jnp.float32)
    value = jax.random.normal(kv, (B, L, D), dtype=jnp.float32)
    params = init_decoder_params(kp, D, F, H, NL)

    out = transformer_decoder(query, value, params)
    out = jax.block_until_ready(out)
    assert out.shape == (B, L, D)
    assert out.dtype == jnp.float32
    print("KERNEL_OK")
</pallas_src>

<mosaic_0001>
module attributes {stable_mosaic.version = 11 : i64} {
  func.func @_linear_kernel(%arg0: i32, %arg1: i32, %arg2: i32, %arg3: memref<16x32xf32, #tpu.memory_space<vmem>>, %arg4: memref<32x32xbf16, #tpu.memory_space<vmem>>, %arg5: memref<1x32xf32, #tpu.memory_space<vmem>>, %arg6: memref<16x32xbf16, #tpu.memory_space<vmem>>, %arg7: memref<16x32xf32, #tpu.memory_space<vmem>>) attributes {dimension_semantics = [#tpu.dimension_semantics<parallel>, #tpu.dimension_semantics<parallel>, #tpu.dimension_semantics<arbitrary>], iteration_bounds = array<i64: 1, 1, 1>, scalar_prefetch = 0 : i64, scratch_operands = 1 : i64, tpu.core_type = #tpu.core_type<tc>, window_params = [{transform_indices = @transform_0, window_bounds = array<i64: 16, 32>}, {transform_indices = @transform_1, window_bounds = array<i64: 32, 32>}, {transform_indices = @transform_2, window_bounds = array<i64: 1, 32>}, {transform_indices = @transform_3, window_bounds = array<i64: 16, 32>}]} {
    %c0_i32 = arith.constant 0 : i32
    %0 = arith.cmpi eq, %arg2, %c0_i32 : i32
    %1 = arith.extui %0 : i1 to i32
    %c0_i32_0 = arith.constant 0 : i32
    %2 = arith.cmpi ne, %1, %c0_i32_0 : i32
    scf.if %2 {
      %cst_10 = arith.constant 0.000000e+00 : f32
      %13 = vector.broadcast %cst_10 : f32 to vector<16x32xf32>
      %c0_11 = arith.constant 0 : index
      %c0_12 = arith.constant 0 : index
      %14 = vector.load %arg7[%c0_11, %c0_12] : memref<16x32xf32, #tpu.memory_space<vmem>>, vector<16x32xf32>
      tpu.vector_store %arg7[%c0_11, %c0_12], %13 {strides = array<i32>} : memref<16x32xf32, #tpu.memory_space<vmem>>, vector<16x32xf32>,
    } else {
    }
    %c0 = arith.constant 0 : index
    %c0_1 = arith.constant 0 : index
    %3 = vector.load %arg7[%c0, %c0_1] : memref<16x32xf32, #tpu.memory_space<vmem>>, vector<16x32xf32>
    %c0_2 = arith.constant 0 : index
    %c0_3 = arith.constant 0 : index
    %4 = vector.load %arg3[%c0_2, %c0_3] : memref<16x32xf32, #tpu.memory_space<vmem>>, vector<16x32xf32>
    %5 = arith.truncf %4 : vector<16x32xf32> to vector<16x32xbf16>
    %c0_4 = arith.constant 0 : index
    %c0_5 = arith.constant 0 : index
    %6 = vector.load %arg4[%c0_4, %c0_5] : memref<32x32xbf16, #tpu.memory_space<vmem>>, vector<32x32xbf16>
    %cst = arith.constant dense<0.000000e+00> : vector<16x32xf32>
    %7 = tpu.matmul %5, %6, %cst {dimension_numbers = #tpu.dot_dimension_numbers<[1], [0], [0], [1], [0, 0, 1, 1], [], []>} : vector<16x32xbf16>, vector<32x32xbf16>, vector<16x32xf32> -> vector<16x32xf32>
    %8 = arith.addf %3, %7 : vector<16x32xf32>
    %c0_6 = arith.constant 0 : index
    %c0_7 = arith.constant 0 : index
    %9 = vector.load %arg7[%c0_6, %c0_7] : memref<16x32xf32, #tpu.memory_space<vmem>>, vector<16x32xf32>
    tpu.vector_store %arg7[%c0_6, %c0_7], %8 {strides = array<i32>} : memref<16x32xf32, #tpu.memory_space<vmem>>, vector<16x32xf32>,
    %c0_i32_8 = arith.constant 0 : i32
    %10 = arith.cmpi eq, %arg2, %c0_i32_8 : i32
    %11 = arith.extui %10 : i1 to i32
    %c0_i32_9 = arith.constant 0 : i32
    %12 = arith.cmpi ne, %11, %c0_i32_9 : i32
    scf.if %12 {
      %c0_10 = arith.constant 0 : index
      %c0_11 = arith.constant 0 : index
      %13 = vector.load %arg7[%c0_10, %c0_11] : memref<16x32xf32, #tpu.memory_space<vmem>>, vector<16x32xf32>
      %c0_12 = arith.constant 0 : index
      %c0_13 = arith.constant 0 : index
      %14 = vector.load %arg5[%c0_12, %c0_13] : memref<1x32xf32, #tpu.memory_space<vmem>>, vector<1x32xf32>
      %15 = vector.broadcast %14 : vector<1x32xf32> to vector<16x32xf32>
      %16 = arith.addf %13, %15 : vector<16x32xf32>
      %17 = arith.truncf %16 : vector<16x32xf32> to vector<16x32xbf16>
      %c0_14 = arith.constant 0 : index
      %c0_15 = arith.constant 0 : index
      %18 = vector.load %arg6[%c0_14, %c0_15] : memref<16x32xbf16, #tpu.memory_space<vmem>>, vector<16x32xbf16>
      tpu.vector_store %arg6[%c0_14, %c0_15], %17 {strides = array<i32>} : memref<16x32xbf16, #tpu.memory_space<vmem>>, vector<16x32xbf16>,
    } else {
    }
    return
  }
  func.func @transform_0(%arg0: i32, %arg1: i32, %arg2: i32) -> (i32, i32) {
    %c0_i32 = arith.constant 0 : i32
    return %arg0, %arg2 : i32, i32
  }
  func.func @transform_1(%arg0: i32, %arg1: i32, %arg2: i32) -> (i32, i32) {
    %c0_i32 = arith.constant 0 : i32
    return %arg2, %arg1 : i32, i32
  }
  func.func @transform_2(%arg0: i32, %arg1: i32, %arg2: i32) -> (i32, i32) {
    %c0_i32 = arith.constant 0 : i32
    %c0_i32_0 = arith.constant 0 : i32
    return %c0_i32, %arg1 : i32, i32
  }
  func.func @transform_3(%arg0: i32, %arg1: i32, %arg2: i32) -> (i32, i32) {
    %c0_i32 = arith.constant 0 : i32
    return %arg0, %arg1 : i32, i32
  }
}

</mosaic_0001>

<llo_original>
// kernel: tpu_custom_call.1
$region0: #{tpu_custom_call.1}
  #allocation0 [shape = 'u32[]', space=smem, size = 0x4, offset = 0x4, fixed_abs, tag = 'smem constant byte address 0x4 - core index']
  #allocation1 [shape = 'u32[144,128]{1,0:T(1,128)}', space=vmem, size = 0x12000, scoped, tag = 'internal scratch']
  #allocation2 [shape = 'f32[16,32]{1,0:T(8,128)}', space=vmem, size = 0x2000, scoped, tag = 'scratch operand']
  %s0 = inlined_call_operand.hbm [shape: f32[16,32], index: 0, kind: input, shape index: {}]
  %s1 = inlined_call_operand.hbm [shape: bf16[32,32], index: 1, kind: input, shape index: {}]
  %s2 = inlined_call_operand.vmem [shape: f32[1,32], index: 2, kind: input, shape index: {}]
  %s3 = inlined_call_operand.hbm [shape: bf16[16,32], index: 3, kind: output, shape index: {}]
  %s4 = sld [smem:[#allocation0]]
  $region38: #{tpu_custom_call.1} parent=0
    _
  %s6 = ssub.s32 1, %s4
  %s7 = scalar_select 0, %s6, %s4
  $region1: #{tpu_custom_call.1} parent=0
    #allocation3 [shape = 'u8[8192]{0}', space=vmem, size = 0x2000, scoped, tag = 'input window, operand 0, single buffered']
    #allocation4 [shape = 's32[1]{0}', space=sflag, size = 0x4, scoped, tag = 'scoped memory for tpu_custom_call.1']
    #allocation5 [shape = 's32[1]{0}', space=sflag, size = 0x4, scoped, tag = 'scoped memory for tpu_custom_call.1']
    #allocation6 [shape = 'u8[8192]{0}', space=vmem, size = 0x2000, scoped, tag = 'input window, operand 1, single buffered']
    #allocation7 [shape = 's32[1]{0}', space=sflag, size = 0x4, scoped, tag = 'scoped memory for tpu_custom_call.1']
    #allocation8 [shape = 'u8[4096]{0}', space=vmem, size = 0x1000, scoped, tag = 'output window, operand 0, single buffered']
    %8 = vsyncpa [#allocation4], 0
    %9 = vsyncpa [#allocation7], 0
    %10 = vsyncpa [#allocation5], 0
    // Predicated region
    $region2: #{tpu_custom_call.1} parent=1 // pred_check
      _
    $region3: #{tpu_custom_call.1} parent=1 // pred_check_branch
      %12 = sbr.rel (0) target = $region5
    $region4: #{tpu_custom_call.1} parent=1 // pred_region
      %s14 = ssub.s32 256, 256
      %15 = vsyncadd [#allocation4], %s14
      %s16 = sshll.u32 [#allocation3], 4
      %s17 = int_to_ptr.vmem [resolvable:$true] %s16
      %22 = dma.hbm_to_vmem [thread:$0]  %s0, 256, %s17, [#allocation4], 128, 128, 8
    $region5: #{tpu_custom_call.1} parent=1 // pred_fallthru
      _
    // Predicated region
    $region6: #{tpu_custom_call.1} parent=1 // pred_check
      _
    $region7: #{tpu_custom_call.1} parent=1 // pred_check_branch
      %24 = sbr.rel (0) target = $region9
    $region8: #{tpu_custom_call.1} parent=1 // pred_region
      %s26 = ssub.s32 256, 256
      %27 = vsyncadd [#allocation7], %s26
      %s28 = sshll.u32 [#allocation6], 4
      %s29 = int_to_ptr.vmem [resolvable:$true] %s28
      %34 = dma.hbm_to_vmem [thread:$0]  %s1, 256, %s29, [#allocation7], 64, 64, 4
    $region9: #{tpu_custom_call.1} parent=1 // pred_fallthru
      _
    // Predicated region
    $region10: #{tpu_custom_call.1} parent=1 // pred_check
      _
    $region11: #{tpu_custom_call.1} parent=1 // pred_check_branch
      %36 = sbr.rel (0) target = $region13
    $region12: #{tpu_custom_call.1} parent=1 // pred_region
      _
    $region13: #{tpu_custom_call.1} parent=1 // pred_fallthru
      _
    // Predicated region
    $region14: #{tpu_custom_call.1} parent=1 // pred_check
      _
    $region15: #{tpu_custom_call.1} parent=1 // pred_check_branch
      %38 = sbr.rel (0) target = $region17
    $region16: #{tpu_custom_call.1} parent=1 // pred_region
      %39 = dma.done [#allocation4], 256
    $region17: #{tpu_custom_call.1} parent=1 // pred_fallthru
      _
    // Predicated region
    $region18: #{tpu_custom_call.1} parent=1 // pred_check
      _
    $region19: #{tpu_custom_call.1} parent=1 // pred_check_branch
      %41 = sbr.rel (0) target = $region21
    $region20: #{tpu_custom_call.1} parent=1 // pred_region
      %42 = dma.done [#allocation7], 256
    $region21: #{tpu_custom_call.1} parent=1 // pred_fallthru
      _
    %p44 = scmp.eq.s32.totalorder 0, 0
    // Predicated region
    $region22: #{tpu_custom_call.1} parent=1 // pred_check
      %p45 = pneg %p44
    $region23: #{tpu_custom_call.1} parent=1 // pred_check_branch
      %47 = sbr.rel (%p45) target = $region25
    $region24: #{tpu_custom_call.1} parent=1 // pred_region
      %vm48 = vcmask 261120
      %49 = vst.msk [vmem:[#allocation2] sm:$0xff] %vm48, 0.0
      %50 = vst.msk [vmem:[#allocation2 + $0x8] sm:$0xff] %vm48, 0.0
    $region25: #{tpu_custom_call.1} parent=1 // pred_fallthru
      _
    %v51 = vld [vmem:[#allocation2] sm:$0xff]
    %v52 = vld [vmem:[#allocation2 + $0x8] sm:$0xff]
    %v53 = vld [vmem:[#allocation3] sm:$0xff]
    %v54 = vld [vmem:[#allocation3 + $0x8] sm:$0xff]
    %v55 = vpack.c.bf16 %v54, %v53
    %v56 = vld [vmem:[#allocation6] sm:$0xf]
    %v57 = vld [vmem:[#allocation6 + $0x4] sm:$0xf]
    %v58 = vld [vmem:[#allocation6 + $0x8] sm:$0xf]
    %v59 = vld [vmem:[#allocation6 + $0xc] sm:$0xf]
    %v64 = vunpack.c.l.b16 %v56
    %v65 = vunpack.c.l.b16 %v57
    %v66 = vunpack.c.l.b16 %v58
    %v67 = vunpack.c.l.b16 %v59
    %v68 = vpack.c.b16 %v65, %v64
    %v69 = vpack.c.b16 %v67, %v66
    %vm72 = vcmask 261120
    %v74 = vsel %vm72, %v55, 0
    %76 = vmatprep.subr.bf16.mxu0 0
    %77 = vmatpush1.bf16.msra.mxu0 %v68
    %78 = vmatprep.subr.bf16.mxu0 0
    %79 = vmatpush1.bf16.msra.mxu0 %v69
    %80 = vmatprep.subr.bf16.mxu0 0
    %81 = vmatpush1.bf16.msra.mxu0 0
    %82 = vmatprep.subr.bf16.mxu0 0
    %83 = vmatpush1.bf16.msra.mxu0 0
    %84 = vmatprep.subr.bf16.mxu0 0
    %85 = vmatpush1.bf16.msra.mxu0 0
    %86 = vmatprep.subr.bf16.mxu0 0
    %87 = vmatpush1.bf16.msra.mxu0 0
    %88 = vmatprep.subr.bf16.mxu0 0
    %89 = vmatpush1.bf16.msra.mxu0 0
    %90 = vmatprep.subr.bf16.mxu0 0
    %91 = vmatpush1.bf16.msra.mxu0 0
    %92 = vmatprep.subr.bf16.mxu0 0
    %93 = vmatpush1.bf16.msra.mxu0 0
    %94 = vmatprep.subr.bf16.mxu0 0
    %95 = vmatpush1.bf16.msra.mxu0 0
    %96 = vmatprep.subr.bf16.mxu0 0
    %97 = vmatpush1.bf16.msra.mxu0 0
    %98 = vmatprep.subr.bf16.mxu0 0
    %99 = vmatpush1.bf16.msra.mxu0 0
    %100 = vmatprep.subr.bf16.mxu0 0
    %101 = vmatpush1.bf16.msra.mxu0 0
    %102 = vmatprep.subr.bf16.mxu0 0
    %103 = vmatpush1.bf16.msra.mxu0 0
    %104 = vmatprep.subr.bf16.mxu0 0
    %105 = vmatpush1.bf16.msra.mxu0 0
    %106 = vmatprep.subr.bf16.mxu0 0
    %107 = vmatpush1.bf16.msra.mxu0 0
    %108 = vmatprep.mubr.bf16.mxu0 0
    %109 = vmatmul.mubr.bf16.gmra.mrb[0].mxu0 %v74
    %v110 = vpop.f32.mrb[0].mxu0
    %v111 = vadd.f32 0.0, %v110
    %v112 = vpop.f32.mrb[0].mxu0
    %v113 = vpop.f32.mrb[0].mxu0
    %v114 = vadd.f32 0.0, %v113
    %v115 = vpop.f32.mrb[0].mxu0
    %116 = vdwg.mxu0
    %v117 = vadd.f32 %v51, %v111
    %v118 = vadd.f32 %v52, %v114
    %119 = vst.msk [vmem:[#allocation2] sm:$0xff] %vm72, %v117
    %120 = vst.msk [vmem:[#allocation2 + $0x8] sm:$0xff] %vm72, %v118
    // Predicated region
    $region26: #{tpu_custom_call.1} parent=1 // pred_check
      %p121 = pneg %p44
    $region27: #{tpu_custom_call.1} parent=1 // pred_check_branch
      %123 = sbr.rel (%p121) target = $region29
    $region28: #{tpu_custom_call.1} parent=1 // pred_region
      %v124 = vld [vmem:[#allocation2] sm:$0xff]
      %v125 = vld [vmem:[#allocation2 + $0x8] sm:$0xff]
      %v126 = vld [vmem:[%s2] sm:$0x1]
      %v128 = vlaneseq
      %v129 = vshrl.u32 %v128, 7
      %v130 = vsub.s32 0, %v129
      %v131 = vrot.slane %v126, %v130
      %v133 = vadd.f32 %v124, %v131
      %v134 = vadd.f32 %v125, %v131
      %v135 = vpack.c.bf16 %v134, %v133
      %v137 = vunpack.c.l.b16 %v135
      %v138 = vunpack.c.h.b16 %v135
      %v139 = vpack.c.b16 %v137, %v137
      %v140 = vpack.c.b16 %v138, %v138
      %vm143 = vcmask 257024
      %144 = vst.msk [vmem:[#allocation8] sm:$0xf] %vm143, %v139
      %145 = vst.msk [vmem:[#allocation8 + $0x4] sm:$0xf] %vm143, %v140
    $region29: #{tpu_custom_call.1} parent=1 // pred_fallthru
      _
    // Predicated region
    $region30: #{tpu_custom_call.1} parent=1 // pred_check
      _
    $region31: #{tpu_custom_call.1} parent=1 // pred_check_branch
      %147 = sbr.rel (0) target = $region33
    $region32: #{tpu_custom_call.1} parent=1 // pred_region
      %s149 = ssub.s32 128, 128
      %150 = vsyncadd [#allocation5], %s149
      %s151 = sshll.u32 [#allocation8], 4
      %s152 = int_to_ptr.vmem [resolvable:$true] %s151
      %157 = dma.vmem_to_hbm [thread:$0]  %s152, 128, %s3, [#allocation5], 64, 64, 4
    $region33: #{tpu_custom_call.1} parent=1 // pred_fallthru
      _
    // Predicated region
    $region34: #{tpu_custom_call.1} parent=1 // pred_check
      _
    $region35: #{tpu_custom_call.1} parent=1 // pred_check_branch
      %159 = sbr.rel (0) target = $region37
    $region36: #{tpu_custom_call.1} parent=1 // pred_region
      %160 = dma.done [#allocation5], 128
    $region37: #{tpu_custom_call.1} parent=1 // pred_fallthru
      _
    %161 = vsyncpa [#allocation4], 1
    %162 = vsyncpa [#allocation7], 1
    %163 = vsyncpa [#allocation5], 1

</llo_original>
